<compile_context>
chip_gen: v7x
topology: tpu7x:2x2x1
jax: 0.10.0
libtpu: 0.0.40
codegen_flags: <defaults>
</compile_context>

<pallas_src>
import functools
import math

import jax
import jax.numpy as jnp
from jax.experimental import pallas as pl
from jax.experimental.pallas import tpu as pltpu

_VMEM_LIMIT = 64 * 1024 * 1024


def _round_up(x, m):
    return ((x + m - 1) // m) * m


def _pick_tile(dim, target, aligns):
    """Largest tile <= target that divides `dim` and is a multiple of one of
    `aligns` (tried in order); falls back to the full dimension."""
    if dim <= target:
        return dim
    for align in aligns:
        t = (target // align) * align
        while t >= align:
            if dim % t == 0:
                return t
            t -= align
    # TODO(synk): a full-dim fallback can blow VMEM for huge, unaligned dims.
    return dim


# ----------------------------- Linear (x @ W [+ b]) --------------------------

def _linear_bias_kernel(x_ref, w_ref, b_ref, o_ref):
    acc = jnp.dot(x_ref[...], w_ref[...], preferred_element_type=jnp.float32)
    o_ref[...] = (acc + b_ref[...].astype(jnp.float32)).astype(o_ref.dtype)


def _linear_nobias_kernel(x_ref, w_ref, o_ref):
    o_ref[...] = jnp.dot(x_ref[...], w_ref[...],
                         preferred_element_type=jnp.float32).astype(o_ref.dtype)


def linear_pallas(x2d, w, b=None, *, tm=512, tn=256):
    """y = x2d @ w (+ b).  x2d: (M, K); w: (K, N); b: (N,) or None."""
    M, K = x2d.shape
    Nout = w.shape[1]

    tm_eff = min(tm, _round_up(M, 8))
    Mp = _round_up(M, tm_eff)
    if Mp != M:
        x2d = jnp.pad(x2d, ((0, Mp - M), (0, 0)))
    tn_eff = _pick_tile(Nout, tn, (128,))

    grid = (Mp // tm_eff, Nout // tn_eff)
    x_spec = pl.BlockSpec((tm_eff, K), lambda i, j: (i, 0))
    w_spec = pl.BlockSpec((K, tn_eff), lambda i, j: (0, j))
    o_spec = pl.BlockSpec((tm_eff, tn_eff), lambda i, j: (i, j))

    if b is None:
        kernel, in_specs, args = _linear_nobias_kernel, [x_spec, w_spec], (x2d, w)
    else:
        b_spec = pl.BlockSpec((1, tn_eff), lambda i, j: (0, j))
        kernel = _linear_bias_kernel
        in_specs = [x_spec, w_spec, b_spec]
        args = (x2d, w, b.reshape(1, Nout))

    itemsize = jnp.dtype(x2d.dtype).itemsize
    cost = pl.CostEstimate(
        flops=2 * Mp * K * Nout,
        transcendentals=0,
        # W is re-streamed once per row block (grid[0] times).
        bytes_accessed=(Mp * K + grid[0] * K * Nout + Mp * Nout) * itemsize,
    )

    out = pl.pallas_call(
        kernel,
        out_shape=jax.ShapeDtypeStruct((Mp, Nout), x2d.dtype),
        grid_spec=pltpu.PrefetchScalarGridSpec(
            num_scalar_prefetch=0, grid=grid,
            in_specs=in_specs, out_specs=o_spec),
        compiler_params=pltpu.CompilerParams(
            dimension_semantics=("parallel", "parallel"),
            vmem_limit_bytes=_VMEM_LIMIT),
        cost_estimate=cost,
    )(*args)
    return out[:M] if Mp != M else out


# ---------------------- Flash attention straight off fused qkv ---------------

def _mha_kernel(q_ref, k_ref, v_ref, o_ref, m_sc, l_sc, acc_sc, *,
                scale, num_heads, head_dim, q_off, k_off, v_off):
    kv_i = pl.program_id(2)

    @pl.when(kv_i == 0)
    def _init():
        m_sc[...] = jnp.full_like(m_sc, -jnp.inf)
        l_sc[...] = jnp.zeros_like(l_sc)
        acc_sc[...] = jnp.zeros_like(acc_sc)

    for h in range(num_heads):                     # static unroll over heads
        qs = q_off + h * head_dim
        ks = k_off + h * head_dim
        vs = v_off + h * head_dim
        q = q_ref[0, :, qs:qs + head_dim] * scale  # (tq, hd) -- scale on q
        k = k_ref[0, :, ks:ks + head_dim]          # (tk, hd)
        v = v_ref[0, :, vs:vs + head_dim]          # (tk, hd)

        # s = (q * scale) @ k^T                     (tq, tk), f32 accumulation
        s = jax.lax.dot_general(q, k, (((1,), (1,)), ((), ())),
                                preferred_element_type=jnp.float32)

        m_prev = m_sc[h]                                            # (tq, 128)
        m_new = jnp.maximum(m_prev, jnp.max(s, axis=-1, keepdims=True))
        alpha = jnp.exp(m_prev[:, :1] - m_new[:, :1])               # (tq, 1)
        p = jnp.exp(s - m_new[:, :1])                               # (tq, tk)
        l_sc[h] = alpha * l_sc[h] + jnp.sum(p, axis=-1, keepdims=True)
        hs = slice(h * head_dim, (h + 1) * head_dim)
        acc_sc[:, hs] = alpha * acc_sc[:, hs] + jax.lax.dot_general(
            p.astype(v.dtype), v, (((1,), (0,)), ((), ())),
            preferred_element_type=jnp.float32)
        m_sc[h] = m_new

    @pl.when(kv_i == pl.num_programs(2) - 1)
    def _finalize():
        for h in range(num_heads):
            hs = slice(h * head_dim, (h + 1) * head_dim)
            inv = pl.reciprocal(l_sc[h][:, :1], approx=True)        # EUP
            acc_sc[:, hs] = acc_sc[:, hs] * inv
        o_ref[0] = acc_sc[...].astype(o_ref.dtype)                  # lane-dense store


def mha_pallas(qkv, *, num_heads, scale, tq=256, tk=256):
    """qkv: (B, N, 3*C) fused projection (q | k | v columns, each head-major).
    Returns softmax(q k^T * scale) v in token-major (B, N, nh*hd) = (B, N, C)."""
    B, N, threeC = qkv.shape
    C = threeC // 3
    head_dim = C // num_heads

    tq_eff = _pick_tile(N, tq, (128, 8))
    tk_eff = _pick_tile(N, tk, (128, 8))
    grid = (B, N // tq_eff, N // tk_eff)

    if C % 128 == 0:
        # Fast path: each BlockSpec picks exactly the q / k / v column block.
        col_blk = C
        q_idx = lambda b, qi, ki: (b, qi, 0)
        k_idx = lambda b, qi, ki: (b, ki, 1)
        v_idx = lambda b, qi, ki: (b, ki, 2)
        offs = (0, 0, 0)
    else:
        # Ragged-C fallback: full-row blocks, q/k/v sliced in-kernel.
        col_blk = threeC
        q_idx = lambda b, qi, ki: (b, qi, 0)
        k_idx = lambda b, qi, ki: (b, ki, 0)
        v_idx = lambda b, qi, ki: (b, ki, 0)
        offs = (0, C, 2 * C)

    kernel = functools.partial(
        _mha_kernel, scale=scale, num_heads=num_heads, head_dim=head_dim,
        q_off=offs[0], k_off=offs[1], v_off=offs[2])

    itemsize = jnp.dtype(qkv.dtype).itemsize
    cost = pl.CostEstimate(
        flops=4 * B * N * N * C,
        transcendentals=B * num_heads * N * N,
        # q read once per row, K/V re-read once per q tile, output write.
        bytes_accessed=(B * N * C + (N // tq_eff) * B * N * 2 * C + B * N * C)
        * itemsize,
    )

    return pl.pallas_call(
        kernel,
        out_shape=jax.ShapeDtypeStruct((B, N, C), qkv.dtype),
        grid_spec=pltpu.PrefetchScalarGridSpec(
            num_scalar_prefetch=0,
            grid=grid,
            in_specs=[
                pl.BlockSpec((1, tq_eff, col_blk), q_idx),
                pl.BlockSpec((1, tk_eff, col_blk), k_idx),
                pl.BlockSpec((1, tk_eff, col_blk), v_idx),
            ],
            out_specs=pl.BlockSpec((1, tq_eff, C), lambda b, qi, ki: (b, qi, 0)),
            scratch_shapes=[
                pltpu.VMEM((num_heads, tq_eff, 128), jnp.float32),  # running max
                pltpu.VMEM((num_heads, tq_eff, 128), jnp.float32),  # running denom
                pltpu.VMEM((tq_eff, C), jnp.float32),               # output acc
            ],
        ),
        compiler_params=pltpu.CompilerParams(
            dimension_semantics=("parallel", "parallel", "arbitrary"),
            vmem_limit_bytes=_VMEM_LIMIT),
        cost_estimate=cost,
    )(qkv, qkv, qkv)


# ------------------------------- Full module ---------------------------------

def attention_pallas(x, w_qkv, w_proj, b_proj, *, num_heads,
                     mxu_dtype=None, attn_tq=256, attn_tk=256):
    B, N, C = x.shape
    assert C % num_heads == 0
    head_dim = C // num_heads
    scale = float(head_dim) ** -0.5

    if mxu_dtype is not None:   # e.g. jnp.bfloat16 for v6e/v7x; accum stays f32
        x, w_qkv, w_proj = (a.astype(mxu_dtype) for a in (x, w_qkv, w_proj))

    x2d = x.reshape(B * N, C)
    # qkv projection (qkv_bias=False -> bias-less kernel).
    qkv = linear_pallas(x2d, w_qkv).reshape(B, N, 3 * C)       # free view
    # Flash attention directly off the fused activation; output already in
    # token-major (B, N, nh*hd), so no activation transpose touches HBM.
    o = mha_pallas(qkv, num_heads=num_heads, scale=scale, tq=attn_tq, tk=attn_tk)
    # Output projection; attn_drop / proj_drop with p=0.0 are identities.
    out2d = linear_pallas(o.reshape(B * N, C), w_proj, b_proj)
    return out2d.reshape(B, N, C)


def attention_reference(x, w_qkv, w_proj, b_proj, *, num_heads):
    """Pure-JAX mirror of the PyTorch Attention.forward."""
    B, N, C = x.shape
    hd = C // num_heads
    scale = float(hd) ** -0.5
    qkv = (x.reshape(B * N, C) @ w_qkv).reshape(B, N, 3, num_heads, hd)
    qkv = jnp.transpose(qkv, (2, 0, 3, 1, 4))
    q, k, v = qkv[0], qkv[1], qkv[2]                     # (B, nh, N, hd)
    attn = jnp.einsum("bhqd,bhkd->bhqk", q, k) * scale
    attn = jax.nn.softmax(attn, axis=-1)
    o = jnp.einsum("bhqk,bhkd->bhqd", attn, v)
    o = jnp.transpose(o, (0, 2, 1, 3)).reshape(B * N, C)
    return (o @ w_proj + b_proj).reshape(B, N, C)


if __name__ == "__main__":
    # Small shapes consistent with the module: batch=2, seq=64, dim=128, heads=8.
    B, N, C, num_heads = 2, 64, 128, 8

    key = jax.random.PRNGKey(0)
    kx, kqkv, kproj, kb = jax.random.split(key, 4)

    x = jax.random.normal(kx, (B, N, C), dtype=jnp.float32)

    bound = 1.0 / math.sqrt(C)
    # PyTorch nn.Linear stores (out, in); weights kept pre-transposed to (in, out)
    # so the kernels compute y = x @ W + b with a lane-dense output.
    w_qkv = jax.random.uniform(kqkv, (C, 3 * C), minval=-bound, maxval=bound,
                               dtype=jnp.float32)
    w_proj = jax.random.uniform(kproj, (C, C), minval=-bound, maxval=bound,
                                dtype=jnp.float32)
    b_proj = jax.random.uniform(kb, (C,), minval=-bound, maxval=bound,
                                dtype=jnp.float32)

    # attn_tk=32 exercises the multi-step online-softmax accumulation path.
    out = attention_pallas(x, w_qkv, w_proj, b_proj, num_heads=num_heads,
                           attn_tk=32)
    jax.block_until_ready(out)

    ref = attention_reference(x, w_qkv, w_proj, b_proj, num_heads=num_heads)
    assert out.shape == (B, N, C)
    err = float(jnp.max(jnp.abs(out - ref)))
    assert jnp.allclose(out, ref, atol=2e-3, rtol=2e-3), (
        f"mismatch vs reference: max abs err = {err}")

    print("KERNEL_OK")
</pallas_src>

<mosaic_0001>
module attributes {stable_mosaic.version = 11 : i64} {
  func.func @_linear_nobias_kernel(%arg0: i32, %arg1: i32, %arg2: memref<128x128xf32, #tpu.memory_space<vmem>>, %arg3: memref<128x128xf32, #tpu.memory_space<vmem>>, %arg4: memref<128x128xf32, #tpu.memory_space<vmem>>) attributes {dimension_semantics = [#tpu.dimension_semantics<parallel>, #tpu.dimension_semantics<parallel>], iteration_bounds = array<i64: 1, 3>, scalar_prefetch = 0 : i64, scratch_operands = 0 : i64, tpu.core_type = #tpu.core_type<tc>, window_params = [{transform_indices = @transform_0, window_bounds = array<i64: 128, 128>}, {transform_indices = @transform_1, window_bounds = array<i64: 128, 128>}, {transform_indices = @transform_2, window_bounds = array<i64: 128, 128>}]} {
    %c0 = arith.constant 0 : index
    %c0_0 = arith.constant 0 : index
    %0 = vector.load %arg2[%c0, %c0_0] : memref<128x128xf32, #tpu.memory_space<vmem>>, vector<128x128xf32>
    %c0_1 = arith.constant 0 : index
    %c0_2 = arith.constant 0 : index
    %1 = vector.load %arg3[%c0_1, %c0_2] : memref<128x128xf32, #tpu.memory_space<vmem>>, vector<128x128xf32>
    %cst = arith.constant dense<0.000000e+00> : vector<128x128xf32>
    %2 = tpu.matmul %0, %1, %cst {dimension_numbers = #tpu.dot_dimension_numbers<[1], [0], [0], [1], [0, 0, 1, 1], [], []>} : vector<128x128xf32>, vector<128x128xf32>, vector<128x128xf32> -> vector<128x128xf32>
    %c0_3 = arith.constant 0 : index
    %c0_4 = arith.constant 0 : index
    %3 = vector.load %arg4[%c0_3, %c0_4] : memref<128x128xf32, #tpu.memory_space<vmem>>, vector<128x128xf32>
    tpu.vector_store %arg4[%c0_3, %c0_4], %2 {strides = array<i32>} : memref<128x128xf32, #tpu.memory_space<vmem>>, vector<128x128xf32>,
    return
  }
  func.func @transform_0(%arg0: i32, %arg1: i32) -> (i32, i32) {
    %c0_i32 = arith.constant 0 : i32
    %c0_i32_0 = arith.constant 0 : i32
    return %arg0, %c0_i32 : i32, i32
  }
  func.func @transform_1(%arg0: i32, %arg1: i32) -> (i32, i32) {
    %c0_i32 = arith.constant 0 : i32
    %c0_i32_0 = arith.constant 0 : i32
    return %c0_i32, %arg1 : i32, i32
  }
  func.func @transform_2(%arg0: i32, %arg1: i32) -> (i32, i32) {
    %c0_i32 = arith.constant 0 : i32
    return %arg0, %arg1 : i32, i32
  }
}

</mosaic_0001>

<llo_original>
// kernel: tpu_custom_call.1
$region0: #{tpu_custom_call.1}
  #allocation0 [shape = 'u32[]', space=smem, size = 0x4, offset = 0x4, fixed_abs, tag = 'smem constant byte address 0x4 - core index']
  #allocation1 [shape = 'u32[144,128]{1,0:T(1,128)}', space=vmem, size = 0x12000, scoped, tag = 'internal scratch']
  %s0 = inlined_call_operand.hbm [shape: f32[128,128], index: 0, kind: input, shape index: {}]
  %s1 = inlined_call_operand.hbm [shape: f32[128,384], index: 1, kind: input, shape index: {}]
  %s2 = inlined_call_operand.hbm [shape: f32[128,384], index: 2, kind: output, shape index: {}]
  %s3 = sld [smem:[#allocation0]]
  $region49: #{tpu_custom_call.1} parent=0
    _
  %s5 = ssub.s32 1, %s3
  %s6 = scalar_select 0, %s5, %s3
  $region1: #{tpu_custom_call.1} parent=0
    #allocation2 [shape = 'u8[65536]{0}', space=vmem, size = 0x10000, scoped, tag = 'input window, operand 0, single buffered']
    #allocation3 [shape = 's32[2]{0}', space=sflag, size = 0x8, scoped, tag = 'scoped memory for tpu_custom_call.1']
    #allocation4 [shape = 's32[2]{0}', space=sflag, size = 0x8, scoped, tag = 'scoped memory for tpu_custom_call.1']
    #allocation5 [shape = 'u8[131072]{0}', space=vmem, size = 0x20000, scoped, tag = 'input window, operand 1']
    #allocation6 [shape = 's32[2]{0}', space=sflag, size = 0x8, scoped, tag = 'scoped memory for tpu_custom_call.1']
    #allocation7 [shape = 'u8[131072]{0}', space=vmem, size = 0x20000, scoped, tag = 'output window, operand 0']
    %7 = vsyncpa [#allocation3], 0
    %8 = vsyncpa [#allocation6], 0
    %s9 = scalar_lea.sflag [#allocation6], 1
    %10 = vsyncpa %s9, 0
    %11 = vsyncpa [#allocation4], 0
    %s12 = scalar_lea.sflag [#allocation4], 1
    %13 = vsyncpa %s12, 0
    loop: start=0, step=1, limit=5
    $region2: #{tpu_custom_call.1} parent=1 // loop_pre_header
      _
    $region3: #{tpu_custom_call.1} parent=1 // loop_header
      %s15 = sphi 0, %s19
      %p16 = scmp.ge.s32.totalorder %s15, 5
      %s22 = sphi 0, %s34
      %s23 = sphi 0, %s30
      %s24 = sphi 0, %s22
      %s25 = sphi 0, %s23
      %s26 = sphi 0, %s24
      %s27 = sphi 0, %s25
      %s37 = sphi 0, %s39
      %s40 = sphi 0, %s37
      %s41 = sphi 0, %s40
      %s57 = sphi 0, %s41
      %s63 = sphi 0, %s65
      %s66 = sphi 0, %s63
      %s67 = sphi 0, %s66
      %s83 = sphi 0, %s67
      %s91 = sphi 0, %s93
      %s94 = sphi 0, %s91
      %s95 = sphi 0, %s94
      %s111 = sphi 0, %s95
    $region4: #{tpu_custom_call.1} parent=1 // loop_header_branch
      %18 = sbr.rel (%p16) target = $region8
    $region5: #{tpu_custom_call.1} parent=1 // loop_body
      %s20 = ssub.s32 %s15, 1
      %s21 = ssub.s32 %s15, 2
      %s28 = sadd.s32 1, %s23
      %p29 = scmp.ge.s32.totalorder %s28, 3
      %s30 = scalar_select %p29, 0, %s28
      %s31 = sadd.s32 1, %s22
      %s32 = scalar_select %p29, %s31, %s22
      %p33 = scmp.ge.s32.totalorder %s32, 1
      %s34 = scalar_select %p33, 0, %s32
      %s35 = ssub.s32 %s22, %s34
      %p36 = scmp.eq.s32.totalorder %s35, 0
      %s38 = sadd.s32 %s37, 1
      %s39 = scalar_select %p36, %s37, %s38
      %p42 = pneg %p36
      %p43 = scmp.eq.s32.totalorder %s15, 2
      %p44 = por %p42, %p43
      %p45 = scmp.ne.s32.totalorder %s37, %s40
      %p46 = scmp.eq.s32.totalorder %s15, 0
      %p47 = por %p45, %p46
      %p48 = scmp.ne.s32.totalorder %s37, %s40
      %p49 = scmp.eq.s32.totalorder %s20, 2
      %p50 = por %p48, %p49
      %p51 = scmp.ne.s32.totalorder %s40, %s41
      %p52 = scmp.eq.s32.totalorder %s20, 0
      %p53 = por %p51, %p52
      %p54 = scmp.ne.s32.totalorder %s40, %s41
      %p55 = scmp.eq.s32.totalorder %s21, 2
      %p56 = por %p54, %p55
      %p58 = scmp.ne.s32.totalorder %s41, %s57
      %p59 = scmp.eq.s32.totalorder %s21, 0
      %p60 = por %p58, %p59
      %s61 = ssub.s32 %s23, %s30
      %p62 = scmp.eq.s32.totalorder %s61, 0
      %s64 = sadd.s32 %s63, 1
      %s65 = scalar_select %p62, %s63, %s64
      %p68 = pneg %p62
      %p69 = scmp.eq.s32.totalorder %s15, 2
      %p70 = por %p68, %p69
      %p71 = scmp.ne.s32.totalorder %s63, %s66
      %p72 = scmp.eq.s32.totalorder %s15, 0
      %p73 = por %p71, %p72
      %p74 = scmp.ne.s32.totalorder %s63, %s66
      %p75 = scmp.eq.s32.totalorder %s20, 2
      %p76 = por %p74, %p75
      %p77 = scmp.ne.s32.totalorder %s66, %s67
      %p78 = scmp.eq.s32.totalorder %s20, 0
      %p79 = por %p77, %p78
      %p80 = scmp.ne.s32.totalorder %s66, %s67
      %p81 = scmp.eq.s32.totalorder %s21, 2
      %p82 = por %p80, %p81
      %p84 = scmp.ne.s32.totalorder %s67, %s83
      %p85 = scmp.eq.s32.totalorder %s21, 0
      %p86 = por %p84, %p85
      %s87 = ssub.s32 %s22, %s34
      %s88 = ssub.s32 %s23, %s30
      %s89 = sor.u32 %s87, %s88
      %p90 = scmp.eq.s32.totalorder %s89, 0
      %s92 = sadd.s32 %s91, 1
      %s93 = scalar_select %p90, %s91, %s92
      %p96 = pneg %p90
      %p97 = scmp.eq.s32.totalorder %s15, 2
      %p98 = por %p96, %p97
      %p99 = scmp.ne.s32.totalorder %s91, %s94
      %p100 = scmp.eq.s32.totalorder %s15, 0
      %p101 = por %p99, %p100
      %p102 = scmp.ne.s32.totalorder %s91, %s94
      %p103 = scmp.eq.s32.totalorder %s20, 2
      %p104 = por %p102, %p103
      %p105 = scmp.ne.s32.totalorder %s94, %s95
      %p106 = scmp.eq.s32.totalorder %s20, 0
      %p107 = por %p105, %p106
      %p108 = scmp.ne.s32.totalorder %s94, %s95
      %p109 = scmp.eq.s32.totalorder %s21, 2
      %p110 = por %p108, %p109
      %p112 = scmp.ne.s32.totalorder %s95, %s111
      %p113 = scmp.eq.s32.totalorder %s21, 0
      %p114 = por %p112, %p113
      %p115 = scmp.le.s32.totalorder 1, %s15
      %p116 = scmp.lt.s32.totalorder %s15, 4
      %p117 = pnand %p115, %p116
      %p118 = pneg %p117
      // Predicated region
      $region9: #{tpu_custom_call.1} parent=5 // pred_check
        _
      $region10: #{tpu_custom_call.1} parent=5 // pred_check_branch
        %120 = sbr.rel (%p117) target = $region12
      $region11: #{tpu_custom_call.1} parent=5 // pred_region
        %s121 = ssub.s32 %s15, 1
        // Predicated region
        $region13: #{tpu_custom_call.1} parent=11 // pred_check
          %p122 = pneg %p53
        $region14: #{tpu_custom_call.1} parent=11 // pred_check_branch
          %124 = sbr.rel (%p122) target = $region16
        $region15: #{tpu_custom_call.1} parent=11 // pred_region
          %s125 = smul.u32 16, %s24
          %s127 = ssub.s32 2048, 2048
          %128 = vsyncadd [#allocation3], %s127
          %s129 = smul.addr %s125, 128
          %s130 = scalar_lea.hbm %s0, %s129
          %s131 = sshll.u32 [#allocation2], 4
          %s132 = int_to_ptr.vmem [resolvable:$true] %s131
          %137 = dma.hbm_to_vmem [thread:$0]  %s130, 2048, %s132, [#allocation3], 128, 128, 8
        $region16: #{tpu_custom_call.1} parent=11 // pred_fallthru
          _
      $region12: #{tpu_custom_call.1} parent=5 // pred_fallthru
        _
      %p138 = scmp.lt.s32.totalorder %s15, 3
      // Predicated region
      $region17: #{tpu_custom_call.1} parent=5 // pred_check
        %p139 = pneg %p138
      $region18: #{tpu_custom_call.1} parent=5 // pred_check_branch
        %141 = sbr.rel (%p139) target = $region20
      $region19: #{tpu_custom_call.1} parent=5 // pred_region
        // Predicated region
        $region21: #{tpu_custom_call.1} parent=19 // pred_check
          %p142 = pneg %p73
        $region22: #{tpu_custom_call.1} parent=19 // pred_check_branch
          %144 = sbr.rel (%p142) target = $region24
        $region23: #{tpu_custom_call.1} parent=19 // pred_region
          %s145 = sand.u32 %s63, 1
          %s146 = scalar_lea.sflag [#allocation6], %s145
          %s147 = sand.u32 %s63, 1
          %s148 = smul.addr %s147, 128
          %s149 = scalar_lea.vmem [#allocation5], %s148
          %s151 = ssub.s32 2048, 2048
          %152 = vsyncadd %s146, %s151
          %s153 = smul.addr %s23, 128
          %s154 = scalar_lea.hbm %s1, %s153
          %s155 = sshll.u32 %s149, 4
          %s156 = int_to_ptr.vmem [resolvable:$true] %s155
          %161 = dma.hbm_to_vmem [thread:$0]  %s154, 2048, %s156, %s146, 384, 128, 8
        $region24: #{tpu_custom_call.1} parent=19 // pred_fallthru
          _
      $region20: #{tpu_custom_call.1} parent=5 // pred_fallthru
        _
      %p162 = scmp.le.s32.totalorder 1, %s15
      %p163 = scmp.lt.s32.totalorder %s15, 4
      %p164 = pnand %p162, %p163
      %p165 = pneg %p164
      // Predicated region
      $region25: #{tpu_custom_call.1} parent=5 // pred_check
        _
      $region26: #{tpu_custom_call.1} parent=5 // pred_check_branch
        %167 = sbr.rel (%p164) target = $region28
      $region27: #{tpu_custom_call.1} parent=5 // pred_region
        %s168 = ssub.s32 %s15, 1
        // Predicated region
        $region29: #{tpu_custom_call.1} parent=27 // pred_check
          %p169 = pneg %p53
        $region30: #{tpu_custom_call.1} parent=27 // pred_check_branch
          %171 = sbr.rel (%p169) target = $region32
        $region31: #{tpu_custom_call.1} parent=27 // pred_region
          %172 = dma.done [#allocation3], 2048
        $region32: #{tpu_custom_call.1} parent=27 // pred_fallthru
          _
        %s173 = sand.u32 %s66, 1
        %s174 = scalar_lea.sflag [#allocation6], %s173
        %s175 = sand.u32 %s66, 1
        %s176 = smul.addr %s175, 128
        %s177 = scalar_lea.vmem [#allocation5], %s176
        // Predicated region
        $region33: #{tpu_custom_call.1} parent=27 // pred_check
          %p178 = pneg %p79
        $region34: #{tpu_custom_call.1} parent=27 // pred_check_branch
          %180 = sbr.rel (%p178) target = $region36
        $region35: #{tpu_custom_call.1} parent=27 // pred_region
          %181 = dma.done %s174, 2048
        $region36: #{tpu_custom_call.1} parent=27 // pred_fallthru
          _
        %p182 = pneg %p53
        %p183 = pneg %p50
        %s184 = sand.u32 %s66, 1
        %s185 = scalar_lea.sflag [#allocation6], %s184
        %s186 = sand.u32 %s66, 1
        %s187 = smul.addr %s186, 128
        %s188 = scalar_lea.vmem [#allocation5], %s187
        %p189 = pneg %p79
        %p190 = pneg %p76
        %p191 = pneg %p107
        %p192 = pneg %p104
        %s193 = sand.u32 %s94, 1
        %s194 = scalar_lea.sflag [#allocation4], %s193
        %s195 = sand.u32 %s94, 1
        %s196 = smul.addr %s195, 128
        %s197 = scalar_lea.vmem [#allocation7], %s196
        %s198 = smul.u32 16, %s24
        %s199 = smul.u32 16, %s24
        %v200 = vld [vmem:[#allocation2] sm:$0xff]
        %v201 = vld [vmem:[#allocation2 + $0x8] sm:$0xff]
        %v202 = vld [vmem:[#allocation2 + $0x10] sm:$0xff]
        %v203 = vld [vmem:[#allocation2 + $0x18] sm:$0xff]
        %v204 = vld [vmem:[#allocation2 + $0x20] sm:$0xff]
        %v205 = vld [vmem:[#allocation2 + $0x28] sm:$0xff]
        %v206 = vld [vmem:[#allocation2 + $0x30] sm:$0xff]
        %v207 = vld [vmem:[#allocation2 + $0x38] sm:$0xff]
        %v208 = vld [vmem:[#allocation2 + $0x40] sm:$0xff]
        %v209 = vld [vmem:[#allocation2 + $0x48] sm:$0xff]
        %v210 = vld [vmem:[#allocation2 + $0x50] sm:$0xff]
        %v211 = vld [vmem:[#allocation2 + $0x58] sm:$0xff]
        %v212 = vld [vmem:[#allocation2 + $0x60] sm:$0xff]
        %v213 = vld [vmem:[#allocation2 + $0x68] sm:$0xff]
        %v214 = vld [vmem:[#allocation2 + $0x70] sm:$0xff]
        %v215 = vld [vmem:[#allocation2 + $0x78] sm:$0xff]
        %v216 = vld [vmem:[%s177] sm:$0xff]
        %v217 = vld [vmem:[%s177 + $0x8] sm:$0xff]
        %v218 = vld [vmem:[%s177 + $0x10] sm:$0xff]
        %v219 = vld [vmem:[%s177 + $0x18] sm:$0xff]
        %v220 = vld [vmem:[%s177 + $0x20] sm:$0xff]
        %v221 = vld [vmem:[%s177 + $0x28] sm:$0xff]
        %v222 = vld [vmem:[%s177 + $0x30] sm:$0xff]
        %v223 = vld [vmem:[%s177 + $0x38] sm:$0xff]
        %v224 = vld [vmem:[%s177 + $0x40] sm:$0xff]
        %v225 = vld [vmem:[%s177 + $0x48] sm:$0xff]
        %v226 = vld [vmem:[%s177 + $0x50] sm:$0xff]
        %v227 = vld [vmem:[%s177 + $0x58] sm:$0xff]
        %v228 = vld [vmem:[%s177 + $0x60] sm:$0xff]
        %v229 = vld [vmem:[%s177 + $0x68] sm:$0xff]
        %v230 = vld [vmem:[%s177 + $0x70] sm:$0xff]
        %v231 = vld [vmem:[%s177 + $0x78] sm:$0xff]
        %232 = vmatprep.subr.mxu0 0.0
        %233 = vmatpush1.msra.mxu0 %v216
        %234 = vmatprep.subr.mxu0 0.0
        %235 = vmatpush1.msra.mxu0 %v217
        %236 = vmatprep.subr.mxu0 0.0
        %237 = vmatpush1.msra.mxu0 %v218
        %238 = vmatprep.subr.mxu0 0.0
        %239 = vmatpush1.msra.mxu0 %v219
        %240 = vmatprep.subr.mxu0 0.0
        %241 = vmatpush1.msra.mxu0 %v220
        %242 = vmatprep.subr.mxu0 0.0
        %243 = vmatpush1.msra.mxu0 %v221
        %244 = vmatprep.subr.mxu0 0.0
        %245 = vmatpush1.msra.mxu0 %v222
        %246 = vmatprep.subr.mxu0 0.0
        %247 = vmatpush1.msra.mxu0 %v223
        %248 = vmatprep.subr.mxu0 0.0
        %249 = vmatpush1.msra.mxu0 %v224
        %250 = vmatprep.subr.mxu0 0.0
        %251 = vmatpush1.msra.mxu0 %v225
        %252 = vmatprep.subr.mxu0 0.0
        %253 = vmatpush1.msra.mxu0 %v226
        %254 = vmatprep.subr.mxu0 0.0
        %255 = vmatpush1.msra.mxu0 %v227
        %256 = vmatprep.subr.mxu0 0.0
        %257 = vmatpush1.msra.mxu0 %v228
        %258 = vmatprep.subr.mxu0 0.0
        %259 = vmatpush1.msra.mxu0 %v229
        %260 = vmatprep.subr.mxu0 0.0
        %261 = vmatpush1.msra.mxu0 %v230
        %262 = vmatprep.subr.mxu0 0.0
        %263 = vmatpush1.msra.mxu0 %v231
        %264 = vmatprep.subr.mxu0 0.0
        %265 = vmatpush1.msra.mxu0 0.0
        %266 = vmatprep.subr.mxu0 0.0
        %267 = vmatpush1.msra.mxu0 0.0
        %268 = vmatprep.subr.mxu0 0.0
        %269 = vmatpush1.msra.mxu0 0.0
        %270 = vmatprep.subr.mxu0 0.0
        %271 = vmatpush1.msra.mxu0 0.0
        %272 = vmatprep.subr.mxu0 0.0
        %273 = vmatpush1.msra.mxu0 0.0
        %274 = vmatprep.subr.mxu0 0.0
        %275 = vmatpush1.msra.mxu0 0.0
        %276 = vmatprep.subr.mxu0 0.0
        %277 = vmatpush1.msra.mxu0 0.0
        %278 = vmatprep.subr.mxu0 0.0
        %279 = vmatpush1.msra.mxu0 0.0
        %280 = vmatprep.subr.mxu0 0.0
        %281 = vmatpush1.msra.mxu0 0.0
        %282 = vmatprep.subr.mxu0 0.0
        %283 = vmatpush1.msra.mxu0 0.0
        %284 = vmatprep.subr.mxu0 0.0
        %285 = vmatpush1.msra.mxu0 0.0
        %286 = vmatprep.subr.mxu0 0.0
        %287 = vmatpush1.msra.mxu0 0.0
        %288 = vmatprep.subr.mxu0 0.0
        %289 = vmatpush1.msra.mxu0 0.0
        %290 = vmatprep.subr.mxu0 0.0
        %291 = vmatpush1.msra.mxu0 0.0
        %292 = vmatprep.subr.mxu0 0.0
        %293 = vmatpush1.msra.mxu0 0.0
        %294 = vmatprep.subr.mxu0 0.0
        %295 = vmatpush1.msra.mxu0 0.0
        %296 = vmatprep.mubr.f32.mxu0 0.0
        %297 = vmatmul.mubr.f32.gmra.mrb[0].mxu0 %v200
        %v298 = vpop.f32.mrb[0].mxu0
        %v299 = vadd.f32 0.0, %v298
        %v300 = vpop.f32.mrb[0].mxu0
        %301 = vmatprep.mubr.f32.mxu0 0.0
        %302 = vmatmul.mubr.f32.gmra.mrb[0].mxu0 %v201
        %v303 = vpop.f32.mrb[0].mxu0
        %v304 = vadd.f32 0.0, %v303
        %v305 = vpop.f32.mrb[0].mxu0
        %306 = vmatprep.mubr.f32.mxu0 0.0
        %307 = vmatmul.mubr.f32.gmra.mrb[0].mxu0 %v202
        %v308 = vpop.f32.mrb[0].mxu0
        %v309 = vadd.f32 0.0, %v308
        %v310 = vpop.f32.mrb[0].mxu0
        %311 = vmatprep.mubr.f32.mxu0 0.0
        %312 = vmatmul.mubr.f32.gmra.mrb[0].mxu0 %v203
        %v313 = vpop.f32.mrb[0].mxu0
        %v314 = vadd.f32 0.0, %v313
        %v315 = vpop.f32.mrb[0].mxu0
        %316 = vmatprep.mubr.f32.mxu0 0.0
        %317 = vmatmul.mubr.f32.gmra.mrb[0].mxu0 %v204
        %v318 = vpop.f32.mrb[0].mxu0
        %v319 = vadd.f32 0.0, %v318
        %v320 = vpop.f32.mrb[0].mxu0
        %321 = vmatprep.mubr.f32.mxu0 0.0
        %322 = vmatmul.mubr.f32.gmra.mrb[0].mxu0 %v205
        %v323 = vpop.f32.mrb[0].mxu0
        %v324 = vadd.f32 0.0, %v323
        %v325 = vpop.f32.mrb[0].mxu0
        %326 = vmatprep.mubr.f32.mxu0 0.0
        %327 = vmatmul.mubr.f32.gmra.mrb[0].mxu0 %v206
        %v328 = vpop.f32.mrb[0].mxu0
        %v329 = vadd.f32 0.0, %v328
        %v330 = vpop.f32.mrb[0].mxu0
        %331 = vmatprep.mubr.f32.mxu0 0.0
        %332 = vmatmul.mubr.f32.gmra.mrb[0].mxu0 %v207
        %v333 = vpop.f32.mrb[0].mxu0
        %v334 = vadd.f32 0.0, %v333
        %v335 = vpop.f32.mrb[0].mxu0
        %336 = vmatprep.mubr.f32.mxu0 0.0
        %337 = vmatmul.mubr.f32.gmra.mrb[0].mxu0 %v208
        %v338 = vpop.f32.mrb[0].mxu0
        %v339 = vadd.f32 0.0, %v338
        %v340 = vpop.f32.mrb[0].mxu0
        %341 = vmatprep.mubr.f32.mxu0 0.0
        %342 = vmatmul.mubr.f32.gmra.mrb[0].mxu0 %v209
        %v343 = vpop.f32.mrb[0].mxu0
        %v344 = vadd.f32 0.0, %v343
        %v345 = vpop.f32.mrb[0].mxu0
        %346 = vmatprep.mubr.f32.mxu0 0.0
        %347 = vmatmul.mubr.f32.gmra.mrb[0].mxu0 %v210
        %v348 = vpop.f32.mrb[0].mxu0
        %v349 = vadd.f32 0.0, %v348
        %v350 = vpop.f32.mrb[0].mxu0
        %351 = vmatprep.mubr.f32.mxu0 0.0
        %352 = vmatmul.mubr.f32.gmra.mrb[0].mxu0 %v211
        %v353 = vpop.f32.mrb[0].mxu0
        %v354 = vadd.f32 0.0, %v353
        %v355 = vpop.f32.mrb[0].mxu0
        %356 = vmatprep.mubr.f32.mxu0 0.0
        %357 = vmatmul.mubr.f32.gmra.mrb[0].mxu0 %v212
        %v358 = vpop.f32.mrb[0].mxu0
        %v359 = vadd.f32 0.0, %v358
        %v360 = vpop.f32.mrb[0].mxu0
        %361 = vmatprep.mubr.f32.mxu0 0.0
        %362 = vmatmul.mubr.f32.gmra.mrb[0].mxu0 %v213
        %v363 = vpop.f32.mrb[0].mxu0
        %v364 = vadd.f32 0.0, %v363
        %v365 = vpop.f32.mrb[0].mxu0
        %366 = vmatprep.mubr.f32.mxu0 0.0
        %367 = vmatmul.mubr.f32.gmra.mrb[0].mxu0 %v214
        %v368 = vpop.f32.mrb[0].mxu0
        %v369 = vadd.f32 0.0, %v368
        %v370 = vpop.f32.mrb[0].mxu0
        %371 = vmatprep.mubr.f32.mxu0 0.0
        %372 = vmatmul.mubr.f32.gmra.mrb[0].mxu0 %v215
        %v373 = vpop.f32.mrb[0].mxu0
        %v374 = vadd.f32 0.0, %v373
        %v375 = vpop.f32.mrb[0].mxu0
        %376 = vdwg.mxu0
        %377 = vst [vmem:[%s197] sm:$0xff] %v299
        %378 = vst [vmem:[%s197 + $0x8] sm:$0xff] %v304
        %379 = vst [vmem:[%s197 + $0x10] sm:$0xff] %v309
        %380 = vst [vmem:[%s197 + $0x18] sm:$0xff] %v314
        %381 = vst [vmem:[%s197 + $0x20] sm:$0xff] %v319
        %382 = vst [vmem:[%s197 + $0x28] sm:$0xff] %v324
        %383 = vst [vmem:[%s197 + $0x30] sm:$0xff] %v329
        %384 = vst [vmem:[%s197 + $0x38] sm:$0xff] %v334
        %385 = vst [vmem:[%s197 + $0x40] sm:$0xff] %v339
        %386 = vst [vmem:[%s197 + $0x48] sm:$0xff] %v344
        %387 = vst [vmem:[%s197 + $0x50] sm:$0xff] %v349
        %388 = vst [vmem:[%s197 + $0x58] sm:$0xff] %v354
        %389 = vst [vmem:[%s197 + $0x60] sm:$0xff] %v359
        %390 = vst [vmem:[%s197 + $0x68] sm:$0xff] %v364
        %391 = vst [vmem:[%s197 + $0x70] sm:$0xff] %v369
        %392 = vst [vmem:[%s197 + $0x78] sm:$0xff] %v374
        %s393 = sand.u32 %s94, 1
        %s394 = scalar_lea.sflag [#allocation4], %s393
        %s395 = sand.u32 %s94, 1
        %s396 = smul.addr %s395, 128
        %s397 = scalar_lea.vmem [#allocation7], %s396
        // Predicated region
        $region37: #{tpu_custom_call.1} parent=27 // pred_check
          %p398 = pneg %p104
        $region38: #{tpu_custom_call.1} parent=27 // pred_check_branch
          %400 = sbr.rel (%p398) target = $region40
        $region39: #{tpu_custom_call.1} parent=27 // pred_region
          %s401 = smul.u32 16, %s24
          %s403 = ssub.s32 2048, 2048
          %404 = vsyncadd %s394, %s403
          %s405 = smul.addr %s401, 3
          %s406 = sadd.s32 %s25, %s405
          %s407 = smul.addr %s406, 128
          %s408 = scalar_lea.hbm %s2, %s407
          %s409 = sshll.u32 %s397, 4
          %s410 = int_to_ptr.vmem [resolvable:$true] %s409
          %415 = dma.vmem_to_hbm [thread:$0]  %s410, 2048, %s408, %s394, 128, 384, 8
        $region40: #{tpu_custom_call.1} parent=27 // pred_fallthru
          _
      $region28: #{tpu_custom_call.1} parent=5 // pred_fallthru
        _
      %p416 = scmp.le.s32.totalorder 2, %s15
      // Predicated region
      $region41: #{tpu_custom_call.1} parent=5 // pred_check
        %p417 = pneg %p416
      $region42: #{tpu_custom_call.1} parent=5 // pred_check_branch
        %419 = sbr.rel (%p417) target = $region44
      $region43: #{tpu_custom_call.1} parent=5 // pred_region
        %s420 = ssub.s32 %s15, 2
        // Predicated region
        $region45: #{tpu_custom_call.1} parent=43 // pred_check
          %p421 = pneg %p110
        $region46: #{tpu_custom_call.1} parent=43 // pred_check_branch
          %423 = sbr.rel (%p421) target = $region48
        $region47: #{tpu_custom_call.1} parent=43 // pred_region
          %s424 = sand.u32 %s95, 1
          %s425 = scalar_lea.sflag [#allocation4], %s424
          %s426 = sand.u32 %s95, 1
          %s427 = smul.addr %s426, 128
          %s428 = scalar_lea.vmem [#allocation7], %s427
          %429 = dma.done %s425, 2048
        $region48: #{tpu_custom_call.1} parent=43 // pred_fallthru
          _
      $region44: #{tpu_custom_call.1} parent=5 // pred_fallthru
        _
    $region6: #{tpu_custom_call.1} parent=1 // loop_footer
      %s19 = sadd.s32 1, %s15
    $region7: #{tpu_custom_call.1} parent=1 // loop_footer_branch
      %14 = sbr.rel target = $region3
    $region8: #{tpu_custom_call.1} parent=1 // loop_exit
      _
    %430 = vsyncpa [#allocation3], 1
    %s431 = scalar_lea.sflag [#allocation3], 1
    %432 = vsyncpa %s431, 1
    %433 = vsyncpa [#allocation6], 1
    %s434 = scalar_lea.sflag [#allocation6], 1
    %435 = vsyncpa %s434, 1
    %436 = vsyncpa [#allocation4], 1
    %s437 = scalar_lea.sflag [#allocation4], 1
    %438 = vsyncpa %s437, 1

</llo_original>
